<compile_context>
chip_gen: v6e
topology: v6e:2x2x1
jax: 0.10.0
libtpu: 0.0.40
codegen_flags: <defaults>
</compile_context>

<pallas_src>
import jax
import jax.numpy as jnp
from jax.experimental import pallas as pl
from jax.experimental.pallas import tpu as pltpu

_LANE = 128
_SUBLANE = 8


def _mean_pool_kernel(h_ref, m_ref, o_ref, acc_ref, den_ref):
    # h_ref:   (TB, TS, TH) hidden-state tile (native dtype: f32 or bf16)
    # m_ref:   (TB, TS)     attention-mask tile (lane-dense)
    # o_ref:   (TB, TH)     f32 output tile, written only on the last S step
    # acc_ref: (TB, TH) f32 sum_embeddings accumulator
    # den_ref: (TB, 1)  f32 sum_mask accumulator
    k = pl.program_id(2)

    @pl.when(k == 0)
    def _():
        acc_ref[...] = jnp.zeros_like(acc_ref)
        den_ref[...] = jnp.zeros_like(den_ref)

    h = h_ref[...]
    m = m_ref[...]
    # 0/1 mask multiply is exact in the hidden-state dtype (also for bf16);
    # the S reduction accumulates in f32 on the VPU (no MXU involved).
    masked = h * m.astype(h.dtype)[:, :, None]
    acc_ref[...] += jnp.sum(masked, axis=1, dtype=jnp.float32)
    den_ref[...] += jnp.sum(m.astype(jnp.float32), axis=-1, keepdims=True)

    @pl.when(k == pl.num_programs(2) - 1)
    def _():
        denom = jnp.maximum(den_ref[...], 1e-9)           # torch.clamp(min=1e-9)
        o_ref[...] = (acc_ref[...] / denom).astype(o_ref.dtype)


def _cdiv(a: int, b: int) -> int:
    return -(-a // b)


def _pick_tile(dim: int, target: int):
    """Tile for a lane-aligned axis.

    Returns (tile, padded_dim). Full dim when small; otherwise the largest
    multiple of 128 <= target that divides dim; if none divides, the candidate
    minimizing zero-padding (ties -> larger tile)."""
    if dim <= target:
        return dim, dim
    candidates = list(range(target, _LANE - 1, -_LANE))
    for t in candidates:
        if dim % t == 0:
            return t, dim
    best = min(candidates, key=lambda t: (_cdiv(dim, t) * t, -t))
    return best, _cdiv(dim, best) * best


def _pick_batch_tile(b: int):
    """Batch rows per block: full batch when small, otherwise 8 (pad)."""
    if b <= _SUBLANE:
        return b, b
    return _SUBLANE, _cdiv(b, _SUBLANE) * _SUBLANE


def mean_pooling(last_hidden_state, attention_mask):
    """Masked mean pooling over axis 1.

    last_hidden_state: (B, S, H) float (f32 or bf16; streamed natively)
    attention_mask:    (B, S)    {0,1} (any numeric dtype)
    returns:           (B, H) float32
    """
    B, S, H = last_hidden_state.shape
    assert attention_mask.shape == (B, S)

    TB, B_pad = _pick_batch_tile(B)
    TS, S_pad = _pick_tile(S, 512)
    TH, H_pad = _pick_tile(H, 512)

    # v7x has 2 TensorCores: grid sharding only happens along "parallel" axes,
    # so make sure there are >= 2 parallel blocks when halving TH is legal.
    if (B_pad // TB) * (H_pad // TH) == 1 and TH % (2 * _LANE) == 0:
        TH //= 2

    # Zero-pad ragged dims in the wrapper. Padded mask entries are 0, so the
    # padded region contributes nothing to either accumulator.
    if (B_pad, S_pad, H_pad) != (B, S, H):
        last_hidden_state = jnp.pad(
            last_hidden_state, ((0, B_pad - B), (0, S_pad - S), (0, H_pad - H)))
        attention_mask = jnp.pad(
            attention_mask, ((0, B_pad - B), (0, S_pad - S)))

    grid = (B_pad // TB, H_pad // TH, S_pad // TS)   # reduction axis innermost

    # Double-buffered hidden-state block dominates VMEM; raise the scoped limit
    # (v5e defaults to 16 MiB) while leaving headroom on v7x's 64 MiB physical.
    h_block_bytes = TB * TS * TH * last_hidden_state.dtype.itemsize
    vmem_limit = int(min(100 << 20, max(32 << 20, 2 * h_block_bytes + (8 << 20))))

    out = pl.pallas_call(
        _mean_pool_kernel,
        out_shape=jax.ShapeDtypeStruct((B_pad, H_pad), jnp.float32),
        grid_spec=pltpu.PrefetchScalarGridSpec(
            num_scalar_prefetch=0,
            grid=grid,
            in_specs=[
                pl.BlockSpec((TB, TS, TH), lambda b, j, k: (b, k, j)),  # hidden
                pl.BlockSpec((TB, TS), lambda b, j, k: (b, k)),          # mask
            ],
            out_specs=pl.BlockSpec((TB, TH), lambda b, j, k: (b, j)),    # resident over k
            scratch_shapes=[
                pltpu.VMEM((TB, TH), jnp.float32),   # sum_embeddings accumulator
                pltpu.VMEM((TB, 1), jnp.float32),    # sum_mask accumulator
            ],
        ),
        compiler_params=pltpu.CompilerParams(
            dimension_semantics=("parallel", "parallel", "arbitrary"),
            vmem_limit_bytes=vmem_limit,
        ),
    )(last_hidden_state, attention_mask)

    if (B_pad, H_pad) != (B, H):
        out = out[:B, :H]
    return out


def mean_pooling_ref(last_hidden_state, attention_mask):
    m = attention_mask[..., None].astype(jnp.float32)
    s = jnp.sum(last_hidden_state.astype(jnp.float32) * m, axis=1)
    d = jnp.maximum(jnp.sum(m, axis=1), 1e-9)
    return s / d


if __name__ == "__main__":
    key = jax.random.PRNGKey(0)
    k1, k2, k3, k4, k5, k6 = jax.random.split(key, 6)

    # Small shapes matching the module's forward: (B, S, H) + (B, S).
    B, S, H = 2, 8, 32
    last_hidden_state = jax.random.normal(k1, (B, S, H), dtype=jnp.float32)
    attention_mask = (jax.random.uniform(k2, (B, S)) > 0.3).astype(jnp.float32)
    attention_mask = attention_mask.at[:, 0].set(1.0)  # keep >=1 token per row

    out = jax.block_until_ready(mean_pooling(last_hidden_state, attention_mask))
    ref = mean_pooling_ref(last_hidden_state, attention_mask)
    assert out.shape == (B, H)
    assert jnp.allclose(out, ref, atol=1e-4, rtol=1e-4), "mismatch vs reference (small)"

    # Tiled path: batch tiling (TB=8), hidden tiling, S accumulation loop.
    B2, S2, H2 = 16, 1024, 256
    h2 = jax.random.normal(k3, (B2, S2, H2), dtype=jnp.float32)
    m2 = (jax.random.uniform(k4, (B2, S2)) > 0.5).astype(jnp.float32)
    m2 = m2.at[:, 0].set(1.0)
    out2 = jax.block_until_ready(mean_pooling(h2, m2))
    ref2 = mean_pooling_ref(h2, m2)
    assert out2.shape == (B2, H2)
    assert jnp.allclose(out2, ref2, atol=1e-4, rtol=1e-4), "mismatch vs reference (tiled)"

    # Ragged shapes (exercise zero-padding) + native bf16 streaming path.
    B3, S3, H3 = 3, 1000, 160
    h3 = jax.random.normal(k5, (B3, S3, H3), dtype=jnp.bfloat16)
    m3 = (jax.random.uniform(k6, (B3, S3)) > 0.5).astype(jnp.float32)
    m3 = m3.at[:, 0].set(1.0)
    out3 = jax.block_until_ready(mean_pooling(h3, m3))
    ref3 = mean_pooling_ref(h3.astype(jnp.float32), m3)
    assert out3.shape == (B3, H3)
    assert jnp.allclose(out3, ref3, atol=2e-3, rtol=2e-3), "mismatch vs reference (ragged/bf16)"

    print("KERNEL_OK")
</pallas_src>

<mosaic_0001>
module attributes {stable_mosaic.version = 11 : i64} {
  func.func @_mean_pool_kernel(%arg0: i32, %arg1: i32, %arg2: i32, %arg3: memref<2x8x32xf32, #tpu.memory_space<vmem>>, %arg4: memref<2x8xf32, #tpu.memory_space<vmem>>, %arg5: memref<2x32xf32, #tpu.memory_space<vmem>>, %arg6: memref<2x32xf32, #tpu.memory_space<vmem>>, %arg7: memref<2x1xf32, #tpu.memory_space<vmem>>) attributes {dimension_semantics = [#tpu.dimension_semantics<parallel>, #tpu.dimension_semantics<parallel>, #tpu.dimension_semantics<arbitrary>], iteration_bounds = array<i64: 1, 1, 1>, scalar_prefetch = 0 : i64, scratch_operands = 2 : i64, tpu.core_type = #tpu.core_type<tc>, window_params = [{transform_indices = @transform_0, window_bounds = array<i64: 2, 8, 32>}, {transform_indices = @transform_1, window_bounds = array<i64: 2, 8>}, {transform_indices = @transform_2, window_bounds = array<i64: 2, 32>}]} {
    %c0_i32 = arith.constant 0 : i32
    %0 = arith.cmpi eq, %arg2, %c0_i32 : i32
    %1 = arith.extui %0 : i1 to i32
    %c0_i32_0 = arith.constant 0 : i32
    %2 = arith.cmpi ne, %1, %c0_i32_0 : i32
    scf.if %2 {
      %cst_16 = arith.constant 0.000000e+00 : f32
      %20 = vector.broadcast %cst_16 : f32 to vector<2x32xf32>
      %c0_17 = arith.constant 0 : index
      %c0_18 = arith.constant 0 : index
      %21 = vector.load %arg6[%c0_17, %c0_18] : memref<2x32xf32, #tpu.memory_space<vmem>>, vector<2x32xf32>
      tpu.vector_store %arg6[%c0_17, %c0_18], %20 {strides = array<i32>} : memref<2x32xf32, #tpu.memory_space<vmem>>, vector<2x32xf32>,
      %cst_19 = arith.constant 0.000000e+00 : f32
      %22 = vector.broadcast %cst_19 : f32 to vector<2x1xf32>
      %c0_20 = arith.constant 0 : index
      %c0_21 = arith.constant 0 : index
      %23 = vector.load %arg7[%c0_20, %c0_21] : memref<2x1xf32, #tpu.memory_space<vmem>>, vector<2x1xf32>
      tpu.vector_store %arg7[%c0_20, %c0_21], %22 {strides = array<i32>} : memref<2x1xf32, #tpu.memory_space<vmem>>, vector<2x1xf32>,
    } else {
    }
    %c0 = arith.constant 0 : index
    %c0_1 = arith.constant 0 : index
    %c0_2 = arith.constant 0 : index
    %3 = vector.load %arg3[%c0, %c0_1, %c0_2] : memref<2x8x32xf32, #tpu.memory_space<vmem>>, vector<2x8x32xf32>
    %c0_3 = arith.constant 0 : index
    %c0_4 = arith.constant 0 : index
    %4 = vector.load %arg4[%c0_3, %c0_4] : memref<2x8xf32, #tpu.memory_space<vmem>>, vector<2x8xf32>
    %5 = vector.shape_cast %4 : vector<2x8xf32> to vector<2x8x1xf32>
    %6 = vector.broadcast %5 : vector<2x8x1xf32> to vector<2x8x32xf32>
    %7 = arith.mulf %3, %6 : vector<2x8x32xf32>
    %c0_5 = arith.constant 0 : index
    %c0_6 = arith.constant 0 : index
    %8 = vector.load %arg6[%c0_5, %c0_6] : memref<2x32xf32, #tpu.memory_space<vmem>>, vector<2x32xf32>
    %cst = arith.constant dense<0.000000e+00> : vector<2x32xf32>
    %9 = vector.multi_reduction <add>, %7, %cst [1] : vector<2x8x32xf32> to vector<2x32xf32>
    %10 = arith.addf %8, %9 : vector<2x32xf32>
    %c0_7 = arith.constant 0 : index
    %c0_8 = arith.constant 0 : index
    %11 = vector.load %arg6[%c0_7, %c0_8] : memref<2x32xf32, #tpu.memory_space<vmem>>, vector<2x32xf32>
    tpu.vector_store %arg6[%c0_7, %c0_8], %10 {strides = array<i32>} : memref<2x32xf32, #tpu.memory_space<vmem>>, vector<2x32xf32>,
    %c0_9 = arith.constant 0 : index
    %c0_10 = arith.constant 0 : index
    %12 = vector.load %arg7[%c0_9, %c0_10] : memref<2x1xf32, #tpu.memory_space<vmem>>, vector<2x1xf32>
    %cst_11 = arith.constant dense<0.000000e+00> : vector<2xf32>
    %13 = vector.multi_reduction <add>, %4, %cst_11 [1] : vector<2x8xf32> to vector<2xf32>
    %14 = vector.shape_cast %13 : vector<2xf32> to vector<2x1xf32>
    %15 = arith.addf %12, %14 : vector<2x1xf32>
    %c0_12 = arith.constant 0 : index
    %c0_13 = arith.constant 0 : index
    %16 = vector.load %arg7[%c0_12, %c0_13] : memref<2x1xf32, #tpu.memory_space<vmem>>, vector<2x1xf32>
    tpu.vector_store %arg7[%c0_12, %c0_13], %15 {strides = array<i32>} : memref<2x1xf32, #tpu.memory_space<vmem>>, vector<2x1xf32>,
    %c0_i32_14 = arith.constant 0 : i32
    %17 = arith.cmpi eq, %arg2, %c0_i32_14 : i32
    %18 = arith.extui %17 : i1 to i32
    %c0_i32_15 = arith.constant 0 : i32
    %19 = arith.cmpi ne, %18, %c0_i32_15 : i32
    scf.if %19 {
      %c0_16 = arith.constant 0 : index
      %c0_17 = arith.constant 0 : index
      %20 = vector.load %arg7[%c0_16, %c0_17] : memref<2x1xf32, #tpu.memory_space<vmem>>, vector<2x1xf32>
      %cst_18 = arith.constant 9.99999971E-10 : f32
      %21 = vector.broadcast %cst_18 : f32 to vector<2x1xf32>
      %22 = arith.maximumf %20, %21 : vector<2x1xf32>
      %c0_19 = arith.constant 0 : index
      %c0_20 = arith.constant 0 : index
      %23 = vector.load %arg6[%c0_19, %c0_20] : memref<2x32xf32, #tpu.memory_space<vmem>>, vector<2x32xf32>
      %24 = vector.broadcast %22 : vector<2x1xf32> to vector<2x32xf32>
      %25 = arith.divf %23, %24 : vector<2x32xf32>
      %c0_21 = arith.constant 0 : index
      %c0_22 = arith.constant 0 : index
      %26 = vector.load %arg5[%c0_21, %c0_22] : memref<2x32xf32, #tpu.memory_space<vmem>>, vector<2x32xf32>
      tpu.vector_store %arg5[%c0_21, %c0_22], %25 {strides = array<i32>} : memref<2x32xf32, #tpu.memory_space<vmem>>, vector<2x32xf32>,
    } else {
    }
    return
  }
  func.func @transform_0(%arg0: i32, %arg1: i32, %arg2: i32) -> (i32, i32, i32) {
    %c0_i32 = arith.constant 0 : i32
    return %arg0, %arg2, %arg1 : i32, i32, i32
  }
  func.func @transform_1(%arg0: i32, %arg1: i32, %arg2: i32) -> (i32, i32) {
    %c0_i32 = arith.constant 0 : i32
    return %arg0, %arg2 : i32, i32
  }
  func.func @transform_2(%arg0: i32, %arg1: i32, %arg2: i32) -> (i32, i32) {
    %c0_i32 = arith.constant 0 : i32
    return %arg0, %arg1 : i32, i32
  }
}

</mosaic_0001>

<llo_original>
// kernel: tpu_custom_call.1
$region0: #{tpu_custom_call.1}
  #allocation0 [shape = 'u32[]', space=smem, size = 0x4, offset = 0x4, fixed_abs, tag = 'smem constant byte address 0x4 - core index']
  #allocation1 [shape = 'u32[144,128]{1,0:T(1,128)}', space=vmem, size = 0x12000, scoped, tag = 'internal scratch']
  #allocation2 [shape = 'f32[2,32]{1,0:T(2,128)}', space=vmem, size = 0x400, scoped, tag = 'scratch operand']
  #allocation3 [shape = 'f32[2,1]{1,0:T(2,128)}', space=vmem, size = 0x400, scoped, tag = 'scratch operand']
  %s0 = inlined_call_operand.hbm [shape: f32[2,8,32], index: 0, kind: input, shape index: {}]
  %s1 = inlined_call_operand.hbm [shape: f32[2,8], index: 1, kind: input, shape index: {}]
  %s2 = inlined_call_operand.hbm [shape: f32[2,32], index: 2, kind: output, shape index: {}]
  %s3 = sld [smem:[#allocation0]]
  $region34: #{tpu_custom_call.1} parent=0
    _
  %s5 = ssub.s32 1, %s3
  %s6 = scalar_select 0, %s5, %s3
  $region1: #{tpu_custom_call.1} parent=0
    #allocation4 [shape = 'u8[8192]{0}', space=vmem, size = 0x2000, scoped, tag = 'input window, operand 0, single buffered']
    #allocation5 [shape = 's32[1]{0}', space=sflag, size = 0x4, scoped, tag = 'scoped memory for tpu_custom_call.1']
    #allocation6 [shape = 's32[1]{0}', space=sflag, size = 0x4, scoped, tag = 'scoped memory for tpu_custom_call.1']
    #allocation7 [shape = 'u8[1024]{0}', space=vmem, size = 0x400, scoped, tag = 'input window, operand 1, single buffered']
    #allocation8 [shape = 's32[1]{0}', space=sflag, size = 0x4, scoped, tag = 'scoped memory for tpu_custom_call.1']
    #allocation9 [shape = 'u8[1024]{0}', space=vmem, size = 0x400, scoped, tag = 'output window, operand 0, single buffered']
    %7 = vsyncpa [#allocation5], 0
    %8 = vsyncpa [#allocation8], 0
    %9 = vsyncpa [#allocation6], 0
    // Predicated region
    $region2: #{tpu_custom_call.1} parent=1 // pred_check
      _
    $region3: #{tpu_custom_call.1} parent=1 // pred_check_branch
      %11 = sbr.rel (0) target = $region5
    $region4: #{tpu_custom_call.1} parent=1 // pred_region
      %s13 = ssub.s32 256, 256
      %14 = vsyncadd [#allocation5], %s13
      %s15 = sshll.u32 [#allocation4], 4
      %s16 = int_to_ptr.vmem [resolvable:$true] %s15
      %21 = dma.hbm_to_vmem [thread:$0]  %s0, 256, %s16, [#allocation5], 128, 128, 8
    $region5: #{tpu_custom_call.1} parent=1 // pred_fallthru
      _
    // Predicated region
    $region6: #{tpu_custom_call.1} parent=1 // pred_check
      _
    $region7: #{tpu_custom_call.1} parent=1 // pred_check_branch
      %23 = sbr.rel (0) target = $region9
    $region8: #{tpu_custom_call.1} parent=1 // pred_region
      %s25 = ssub.s32 32, 32
      %26 = vsyncadd [#allocation8], %s25
      %s28 = sshll.u32 [#allocation7], 4
      %s29 = int_to_ptr.vmem [resolvable:$true] %s28
      %31 = dma.hbm_to_vmem [thread:$0]  %s1, 32, %s29, [#allocation8]
    $region9: #{tpu_custom_call.1} parent=1 // pred_fallthru
      _
    // Predicated region
    $region10: #{tpu_custom_call.1} parent=1 // pred_check
      _
    $region11: #{tpu_custom_call.1} parent=1 // pred_check_branch
      %33 = sbr.rel (0) target = $region13
    $region12: #{tpu_custom_call.1} parent=1 // pred_region
      %34 = dma.done [#allocation5], 256
    $region13: #{tpu_custom_call.1} parent=1 // pred_fallthru
      _
    // Predicated region
    $region14: #{tpu_custom_call.1} parent=1 // pred_check
      _
    $region15: #{tpu_custom_call.1} parent=1 // pred_check_branch
      %36 = sbr.rel (0) target = $region17
    $region16: #{tpu_custom_call.1} parent=1 // pred_region
      %37 = dma.done [#allocation8], 32
    $region17: #{tpu_custom_call.1} parent=1 // pred_fallthru
      _
    %p38 = scmp.eq.s32.totalorder 0, 0
    // Predicated region
    $region18: #{tpu_custom_call.1} parent=1 // pred_check
      %p39 = pneg %p38
    $region19: #{tpu_custom_call.1} parent=1 // pred_check_branch
      %41 = sbr.rel (%p39) target = $region21
    $region20: #{tpu_custom_call.1} parent=1 // pred_region
      %vm42 = vcmask 254976
      %43 = vst.msk [vmem:[#allocation2] sm:$0x3] %vm42, 0.0
      %vm44 = vcmask 1024
      %45 = vst.msk [vmem:[#allocation3] sm:$0x3] %vm44, 0.0
    $region21: #{tpu_custom_call.1} parent=1 // pred_fallthru
      _
    %v46 = vld [vmem:[#allocation4] sm:$0xff]
    %v47 = vld [vmem:[#allocation4 + $0x8] sm:$0xff]
    %v48 = vld [vmem:[#allocation7] sm:$0x3]
    %v49 = vlaneseq
    %v50 = vshrl.u32 %v49, 7
    %v51 = vsub.s32 0, %v50
    %v52 = vrot.slane %v48, %v51
    %54 = vbcast.lane.b32.xlu0 %v52, 256
    %v55 = vpop.permute.xlu0 %54
    %v56 = vlaneseq
    %v57 = vshrl.u32 %v56, 7
    %v58 = vsub.s32 1, %v57
    %v59 = vrot.slane %v48, %v58
    %61 = vbcast.lane.b32.xlu0 %v59, 256
    %v62 = vpop.permute.xlu0 %61
    %v63 = vmul.f32 %v46, %v55
    %v64 = vmul.f32 %v47, %v62
    %v65 = vld [vmem:[#allocation2] sm:$0x3]
    %vm66 = vcmask 261120
    %v67 = vsel %vm66, %v63, 0.0
    %v68 = vrot.slane %v67, 4
    %v69 = vadd.f32 %v67, %v68
    %v70 = vrot.slane %v69, 2
    %v71 = vadd.f32 %v69, %v70
    %v72 = vrot.slane %v71, 1
    %v73 = vadd.f32 %v71, %v72
    %v74 = vsel %vm66, %v64, 0.0
    %v75 = vrot.slane %v74, 4
    %v76 = vadd.f32 %v74, %v75
    %v77 = vrot.slane %v76, 2
    %v78 = vadd.f32 %v76, %v77
    %v79 = vrot.slane %v78, 1
    %v80 = vadd.f32 %v78, %v79
    %vm83 = vcmask 1041409
    %v84 = vsel %vm83, %v80, %v73
    %v86 = vadd.f32 %v65, %v84
    %vm87 = vcmask 254976
    %88 = vst.msk [vmem:[#allocation2] sm:$0x3] %vm87, %v86
    %v89 = vld [vmem:[#allocation3] sm:$0x3]
    %vm90 = vcmask 58368
    %v91 = vsel %vm90, %v48, 0.0
    %92 = vadd.xlane.f32.xlu0 %v91
    %v93 = vpop.xlane.xlu0 %92
    %v94 = vadd.f32 %v89, %v93
    %vm95 = vcmask 1024
    %96 = vst.msk [vmem:[#allocation3] sm:$0x3] %vm95, %v94
    // Predicated region
    $region22: #{tpu_custom_call.1} parent=1 // pred_check
      %p97 = pneg %p38
    $region23: #{tpu_custom_call.1} parent=1 // pred_check_branch
      %99 = sbr.rel (%p97) target = $region25
    $region24: #{tpu_custom_call.1} parent=1 // pred_region
      %v100 = vld [vmem:[#allocation3] sm:$0x3]
      %v101 = vmax.f32 %v100, 1e-09
      %v102 = vld [vmem:[#allocation2] sm:$0x3]
      %104 = vset.pattern.permute.xlu0 0
      %105 = vperm.xlu0 %104, %v101
      %v106 = vpop.permute.xlu0 %105
      %v108 = vrcp.pop %v106
      %v109 = vmul.f32 %v102, %v108
      %110 = vst.msk [vmem:[#allocation9] sm:$0x3] %vm87, %v109
    $region25: #{tpu_custom_call.1} parent=1 // pred_fallthru
      _
    // Predicated region
    $region26: #{tpu_custom_call.1} parent=1 // pred_check
      _
    $region27: #{tpu_custom_call.1} parent=1 // pred_check_branch
      %112 = sbr.rel (0) target = $region29
    $region28: #{tpu_custom_call.1} parent=1 // pred_region
      %s114 = ssub.s32 32, 32
      %115 = vsyncadd [#allocation6], %s114
      %s117 = sshll.u32 [#allocation9], 4
      %s118 = int_to_ptr.vmem [resolvable:$true] %s117
      %120 = dma.vmem_to_hbm [thread:$0]  %s118, 32, %s2, [#allocation6]
    $region29: #{tpu_custom_call.1} parent=1 // pred_fallthru
      _
    // Predicated region
    $region30: #{tpu_custom_call.1} parent=1 // pred_check
      _
    $region31: #{tpu_custom_call.1} parent=1 // pred_check_branch
      %122 = sbr.rel (0) target = $region33
    $region32: #{tpu_custom_call.1} parent=1 // pred_region
      %123 = dma.done [#allocation6], 32
    $region33: #{tpu_custom_call.1} parent=1 // pred_fallthru
      _
    %124 = vsyncpa [#allocation5], 1
    %125 = vsyncpa [#allocation8], 1
    %126 = vsyncpa [#allocation6], 1

</llo_original>
